<compile_context>
chip_gen: v5e
topology: v5e:2x2
jax: 0.10.0
libtpu: 0.0.40
codegen_flags: <defaults>
</compile_context>

<pallas_src>
import jax
import jax.numpy as jnp
from jax.experimental import pallas as pl
from jax.experimental.pallas import tpu as pltpu


def _head_kernel(x_ref, w_ref, b_ref, o_ref):
    # x_ref: (TN, H) node tile, w_ref: (H, L) resident weight,
    # b_ref: (1, L) bias, o_ref: (TN, L) logits tile.
    logits = jnp.dot(x_ref[...], w_ref[...], preferred_element_type=jnp.float32)
    o_ref[...] = (logits + b_ref[...].astype(jnp.float32)).astype(o_ref.dtype)


def prepare_head_params(weight, bias):
    """One-time parameter prep (do at model load, NOT per forward call).

    weight: [L, H] nn.Linear weight (PyTorch layout)
    bias:   [L]
    returns (w_t [H, L], b2d [1, L])
    """
    w_t = jnp.asarray(weight).T
    b2d = jnp.asarray(bias).reshape(1, -1)
    return w_t, b2d


def _num_tensorcores() -> int:
    """Best-effort TensorCores-per-chip query (v7x has 2, v5e/v6e have 1)."""
    try:
        info = pltpu.get_tpu_info()
    except Exception:
        return 1
    for name in ("num_cores", "core_count", "num_tensorcores",
                 "tensorcore_count", "num_cores_per_chip"):
        v = getattr(info, name, None)
        if isinstance(v, int) and 1 <= v <= 4:
            return v
    return 1


def _vmem_capacity_bytes() -> int:
    """Per-core VMEM capacity; conservative 64 MiB fallback (v7x)."""
    try:
        cap = int(getattr(pltpu.get_tpu_info(), "vmem_capacity_bytes", 0))
        if cap > 0:
            return cap
    except Exception:
        pass
    return 64 << 20


def node_classification_head(x, w_t, b2d, *, tile_n=1024):
    """Forward pass of MultiLabelNodeClassificationHead (inference).

    x:   [N, H]  activations (f32 or bf16)
    w_t: [H, L]  pre-transposed classifier weight (see prepare_head_params)
    b2d: [1, L]  bias
    returns [N, L] logits in x.dtype
    """
    N, H = x.shape
    H_w, L = w_t.shape
    assert H_w == H and b2d.shape == (1, L)

    xb = jnp.dtype(x.dtype).itemsize
    wb = jnp.dtype(w_t.dtype).itemsize
    bb = jnp.dtype(b2d.dtype).itemsize
    ob = xb  # output dtype == x dtype

    # Sublane quantum: 8 rows for 32-bit, 16 for 16-bit, 32 for 8-bit dtypes.
    row_q = 8 * max(1, 4 // xb)

    # ---- node-tile selection (no padding of x; ragged tail is a Pallas
    # partial block whose out-of-bounds rows are masked on store) -----------
    tile_n = max(row_q, (int(tile_n) // row_q) * row_q)
    tile_n = min(tile_n, ((N + row_q - 1) // row_q) * row_q)

    # Only split a small N across blocks when the chip has >1 TensorCore.
    n_cores = _num_tensorcores()
    if n_cores > 1 and pl.cdiv(N, tile_n) < n_cores:
        per_core = ((pl.cdiv(N, n_cores) + row_q - 1) // row_q) * row_q
        tile_n = min(tile_n, max(row_q, per_core))

    # ---- fit the double-buffered working set into this chip's VMEM --------
    cap = _vmem_capacity_bytes()

    def working_set(t):
        return (2 * t * H * xb      # streamed x tile (double-buffered)
                + 2 * t * L * ob    # output tile (double-buffered)
                + 2 * H * L * wb    # resident weight (worst case 2 buffers)
                + 2 * L * bb)       # resident bias

    while tile_n > row_q and working_set(tile_n) > int(0.7 * cap):
        tile_n = max(row_q, ((tile_n // 2) // row_q) * row_q)

    grid_n = pl.cdiv(N, tile_n)
    vmem_limit = int(min(1.25 * working_set(tile_n) + (8 << 20), cap))

    cost = pl.CostEstimate(
        flops=2 * N * H * L,
        transcendentals=0,
        bytes_accessed=N * H * xb + H * L * wb + L * bb + N * L * ob,
    )

    def call(single_buffer_weights):
        if single_buffer_weights:
            # Weight/bias blocks are grid-invariant (always block (0, 0)):
            # a single VMEM buffer is enough and halves their footprint.
            w_spec = pl.BlockSpec((H, L), lambda i: (0, 0),
                                  pipeline_mode=pl.Buffered(1))
            b_spec = pl.BlockSpec((1, L), lambda i: (0, 0),
                                  pipeline_mode=pl.Buffered(1))
        else:
            w_spec = pl.BlockSpec((H, L), lambda i: (0, 0))
            b_spec = pl.BlockSpec((1, L), lambda i: (0, 0))
        return pl.pallas_call(
            _head_kernel,
            out_shape=jax.ShapeDtypeStruct((N, L), x.dtype),
            grid_spec=pltpu.PrefetchScalarGridSpec(
                num_scalar_prefetch=0,
                grid=(grid_n,),
                in_specs=[
                    pl.BlockSpec((tile_n, H), lambda i: (i, 0)),  # x tile
                    w_spec,                                       # weight
                    b_spec,                                       # bias
                ],
                out_specs=pl.BlockSpec((tile_n, L), lambda i: (i, 0)),
            ),
            compiler_params=pltpu.CompilerParams(
                # "parallel" lets the runtime shard the node axis across
                # TensorCores on multi-TC chips (v7x); no-op on v5e/v6e.
                dimension_semantics=("parallel",),
                vmem_limit_bytes=vmem_limit,
            ),
            cost_estimate=cost,
        )(x, w_t, b2d)

    try:
        return call(True)
    except Exception:
        # jax version without BlockSpec(pipeline_mode=...): default buffering.
        return call(False)


if __name__ == "__main__":
    # Small shapes consistent with the module: hidden_size=32, num_labels=2.
    hidden_size = 32
    num_labels = 2

    key = jax.random.PRNGKey(0)
    kx, kw, kb = jax.random.split(key, 3)

    weight = jax.random.normal(kw, (num_labels, hidden_size), dtype=jnp.float32) * 0.02
    bias = jax.random.normal(kb, (num_labels,), dtype=jnp.float32) * 0.02

    # One-time parameter prep, hoisted out of the per-call path.
    w_t, b2d = prepare_head_params(weight, bias)

    ok = True
    for num_nodes in (16, 13):  # aligned and ragged node counts
        xk = jax.random.fold_in(kx, num_nodes)
        x = jax.random.normal(xk, (num_nodes, hidden_size), dtype=jnp.float32)

        out = jax.block_until_ready(node_classification_head(x, w_t, b2d))

        # Reference in plain JAX (dropout = identity at inference).
        ref = x @ weight.T + bias
        ok &= out.shape == (num_nodes, num_labels)
        ok &= bool(jnp.allclose(out, ref, atol=1e-5, rtol=1e-5))

    # bf16 activation/weight path (halves the HBM-bound x stream + writeback).
    x16 = jax.random.normal(jax.random.fold_in(kx, 99),
                            (16, hidden_size), dtype=jnp.float32).astype(jnp.bfloat16)
    w16, b16 = prepare_head_params(weight.astype(jnp.bfloat16), bias)
    out16 = jax.block_until_ready(node_classification_head(x16, w16, b16))
    ref16 = (x16.astype(jnp.float32)
             @ weight.astype(jnp.bfloat16).astype(jnp.float32).T + bias)
    ok &= out16.shape == (16, num_labels)
    ok &= bool(jnp.allclose(out16.astype(jnp.float32), ref16, atol=2e-2, rtol=2e-2))

    assert ok, "mismatch vs reference"
    print("KERNEL_OK")
</pallas_src>

<mosaic_0001>
module attributes {stable_mosaic.version = 11 : i64} {
  func.func @_head_kernel(%arg0: i32, %arg1: memref<16x32xf32, #tpu.memory_space<vmem>>, %arg2: memref<32x2xf32, #tpu.memory_space<vmem>>, %arg3: memref<1x2xf32, #tpu.memory_space<vmem>>, %arg4: memref<16x2xf32, #tpu.memory_space<vmem>>) attributes {dimension_semantics = [#tpu.dimension_semantics<parallel>], iteration_bounds = array<i64: 1>, scalar_prefetch = 0 : i64, scratch_operands = 0 : i64, tpu.core_type = #tpu.core_type<tc>, window_params = [{transform_indices = @transform_0, window_bounds = array<i64: 16, 32>}, {pipeline_mode = #tpu.pipeline_mode<synchronous>, transform_indices = @transform_1, window_bounds = array<i64: 32, 2>}, {pipeline_mode = #tpu.pipeline_mode<synchronous>, transform_indices = @transform_2, window_bounds = array<i64: 1, 2>}, {transform_indices = @transform_3, window_bounds = array<i64: 16, 2>}]} {
    %c0 = arith.constant 0 : index
    %c0_0 = arith.constant 0 : index
    %0 = vector.load %arg1[%c0, %c0_0] : memref<16x32xf32, #tpu.memory_space<vmem>>, vector<16x32xf32>
    %c0_1 = arith.constant 0 : index
    %c0_2 = arith.constant 0 : index
    %1 = vector.load %arg2[%c0_1, %c0_2] : memref<32x2xf32, #tpu.memory_space<vmem>>, vector<32x2xf32>
    %cst = arith.constant dense<0.000000e+00> : vector<16x2xf32>
    %2 = tpu.matmul %0, %1, %cst {dimension_numbers = #tpu.dot_dimension_numbers<[1], [0], [0], [1], [0, 0, 1, 1], [], []>} : vector<16x32xf32>, vector<32x2xf32>, vector<16x2xf32> -> vector<16x2xf32>
    %c0_3 = arith.constant 0 : index
    %c0_4 = arith.constant 0 : index
    %3 = vector.load %arg3[%c0_3, %c0_4] : memref<1x2xf32, #tpu.memory_space<vmem>>, vector<1x2xf32>
    %4 = vector.broadcast %3 : vector<1x2xf32> to vector<16x2xf32>
    %5 = arith.addf %2, %4 : vector<16x2xf32>
    %c0_5 = arith.constant 0 : index
    %c0_6 = arith.constant 0 : index
    %6 = vector.load %arg4[%c0_5, %c0_6] : memref<16x2xf32, #tpu.memory_space<vmem>>, vector<16x2xf32>
    tpu.vector_store %arg4[%c0_5, %c0_6], %5 {strides = array<i32>} : memref<16x2xf32, #tpu.memory_space<vmem>>, vector<16x2xf32>,
    return
  }
  func.func @transform_0(%arg0: i32) -> (i32, i32) {
    %c0_i32 = arith.constant 0 : i32
    %c0_i32_0 = arith.constant 0 : i32
    return %arg0, %c0_i32 : i32, i32
  }
  func.func @transform_1(%arg0: i32) -> (i32, i32) {
    %c0_i32 = arith.constant 0 : i32
    %c0_i32_0 = arith.constant 0 : i32
    %c0_i32_1 = arith.constant 0 : i32
    return %c0_i32, %c0_i32_0 : i32, i32
  }
  func.func @transform_2(%arg0: i32) -> (i32, i32) {
    %c0_i32 = arith.constant 0 : i32
    %c0_i32_0 = arith.constant 0 : i32
    %c0_i32_1 = arith.constant 0 : i32
    return %c0_i32, %c0_i32_0 : i32, i32
  }
  func.func @transform_3(%arg0: i32) -> (i32, i32) {
    %c0_i32 = arith.constant 0 : i32
    %c0_i32_0 = arith.constant 0 : i32
    return %arg0, %c0_i32 : i32, i32
  }
}

module attributes {stable_mosaic.version = 11 : i64} {
  func.func @_head_kernel(%arg0: i32, %arg1: memref<16x32xf32, #tpu.memory_space<vmem>>, %arg2: memref<32x2xf32, #tpu.memory_space<vmem>>, %arg3: memref<1x2xf32, #tpu.memory_space<vmem>>, %arg4: memref<16x2xf32, #tpu.memory_space<vmem>>) attributes {dimension_semantics = [#tpu.dimension_semantics<parallel>], iteration_bounds = array<i64: 1>, scalar_prefetch = 0 : i64, scratch_operands = 0 : i64, tpu.core_type = #tpu.core_type<tc>, window_params = [{transform_indices = @transform_0, window_bounds = array<i64: 16, 32>}, {pipeline_mode = #tpu.pipeline_mode<synchronous>, transform_indices = @transform_1, window_bounds = array<i64: 32, 2>}, {pipeline_mode = #tpu.pipeline_mode<synchronous>, transform_indices = @transform_2, window_bounds = array<i64: 1, 2>}, {transform_indices = @transform_3, window_bounds = array<i64: 16, 2>}]} {
    %c0 = arith.constant 0 : index
    %c0_0 = arith.constant 0 : index
    %0 = vector.load %arg1[%c0, %c0_0] : memref<16x32xf32, #tpu.memory_space<vmem>>, vector<16x32xf32>
    %c0_1 = arith.constant 0 : index
    %c0_2 = arith.constant 0 : index
    %1 = vector.load %arg2[%c0_1, %c0_2] : memref<32x2xf32, #tpu.memory_space<vmem>>, vector<32x2xf32>
    %cst = arith.constant dense<0.000000e+00> : vector<16x2xf32>
    %2 = tpu.matmul %0, %1, %cst {dimension_numbers = #tpu.dot_dimension_numbers<[1], [0], [0], [1], [0, 0, 1, 1], [], []>} : vector<16x32xf32>, vector<32x2xf32>, vector<16x2xf32> -> vector<16x2xf32>
    %c0_3 = arith.constant 0 : index
    %c0_4 = arith.constant 0 : index
    %3 = vector.load %arg3[%c0_3, %c0_4] : memref<1x2xf32, #tpu.memory_space<vmem>>, vector<1x2xf32>
    %4 = vector.broadcast %3 : vector<1x2xf32> to vector<16x2xf32>
    %5 = arith.addf %2, %4 : vector<16x2xf32>
    %c0_5 = arith.constant 0 : index
    %c0_6 = arith.constant 0 : index
    %6 = vector.load %arg4[%c0_5, %c0_6] : memref<16x2xf32, #tpu.memory_space<vmem>>, vector<16x2xf32>
    tpu.vector_store %arg4[%c0_5, %c0_6], %5 {strides = array<i32>} : memref<16x2xf32, #tpu.memory_space<vmem>>, vector<16x2xf32>,
    return
  }
  func.func @transform_0(%arg0: i32) -> (i32, i32) {
    %c0_i32 = arith.constant 0 : i32
    %c0_i32_0 = arith.constant 0 : i32
    return %arg0, %c0_i32 : i32, i32
  }
  func.func @transform_1(%arg0: i32) -> (i32, i32) {
    %c0_i32 = arith.constant 0 : i32
    %c0_i32_0 = arith.constant 0 : i32
    %c0_i32_1 = arith.constant 0 : i32
    return %c0_i32, %c0_i32_0 : i32, i32
  }
  func.func @transform_2(%arg0: i32) -> (i32, i32) {
    %c0_i32 = arith.constant 0 : i32
    %c0_i32_0 = arith.constant 0 : i32
    %c0_i32_1 = arith.constant 0 : i32
    return %c0_i32, %c0_i32_0 : i32, i32
  }
  func.func @transform_3(%arg0: i32) -> (i32, i32) {
    %c0_i32 = arith.constant 0 : i32
    %c0_i32_0 = arith.constant 0 : i32
    return %arg0, %c0_i32 : i32, i32
  }
}

</mosaic_0001>

<llo_original>
// kernel: tpu_custom_call.1
$region0: #{tpu_custom_call.1}
  #allocation0 [shape = 'u32[]', space=smem, size = 0x4, offset = 0x4, fixed_abs, tag = 'smem constant byte address 0x4 - core index']
  #allocation1 [shape = 'u32[72,128]{1,0:T(1,128)}', space=vmem, size = 0x9000, scoped, tag = 'internal scratch']
  %s0 = inlined_call_operand.vmem [shape: f32[16,32], index: 0, kind: input, shape index: {}]
  %s1 = inlined_call_operand.vmem [shape: f32[32,2], index: 1, kind: input, shape index: {}]
  %s2 = inlined_call_operand.vmem [shape: f32[1,2], index: 2, kind: input, shape index: {}]
  %s3 = inlined_call_operand.vmem [shape: f32[16,2], index: 3, kind: output, shape index: {}]
  %s4 = sld [smem:[#allocation0]]
  $region22: #{tpu_custom_call.1} parent=0
    _
  %s6 = ssub.s32 1, %s4
  %s7 = scalar_select 0, %s6, %s4
  // Predicated region
  $region2: #{tpu_custom_call.1} parent=0 // pred_check
    _
  $region3: #{tpu_custom_call.1} parent=0 // pred_check_branch
    %9 = sbr.rel (0) target = $region5
  $region4: #{tpu_custom_call.1} parent=0 // pred_region
    _
  $region5: #{tpu_custom_call.1} parent=0 // pred_fallthru
    _
  // Predicated region
  $region6: #{tpu_custom_call.1} parent=0 // pred_check
    _
  $region7: #{tpu_custom_call.1} parent=0 // pred_check_branch
    %11 = sbr.rel (0) target = $region9
  $region8: #{tpu_custom_call.1} parent=0 // pred_region
    _
  $region9: #{tpu_custom_call.1} parent=0 // pred_fallthru
    _
  // Predicated region
  $region10: #{tpu_custom_call.1} parent=0 // pred_check
    _
  $region11: #{tpu_custom_call.1} parent=0 // pred_check_branch
    %13 = sbr.rel (0) target = $region13
  $region12: #{tpu_custom_call.1} parent=0 // pred_region
    _
  $region13: #{tpu_custom_call.1} parent=0 // pred_fallthru
    _
  %v14 = vld [vmem:[%s0] sm:$0xff]
  %v15 = vld [vmem:[%s0 + $0x8] sm:$0xff]
  %v16 = vld [vmem:[%s1] sm:$0xff]
  %v17 = vld [vmem:[%s1 + $0x8] sm:$0xff]
  %v18 = vld [vmem:[%s1 + $0x10] sm:$0xff]
  %v19 = vld [vmem:[%s1 + $0x18] sm:$0xff]
  %v20 = vld [vmem:[%s2] sm:$0x1]
  %v22 = vperm.slane %v20, 0
  %vm24 = vcmask 261120
  %v26 = vsel %vm24, %v14, 0
  %v29 = vsel %vm24, %v15, 0
  %31 = vmatpush.msra.mxu0 0.0
  %32 = vmatpush.msra.mxu0 0.0
  %33 = vmatpush.msra.mxu0 0.0
  %34 = vmatpush.msra.mxu0 0.0
  %35 = vmatpush.msra.mxu0 0.0
  %36 = vmatpush.msra.mxu0 0.0
  %37 = vmatpush.msra.mxu0 0.0
  %38 = vmatpush.msra.mxu0 0.0
  %39 = vmatpush.msra.mxu0 0.0
  %40 = vmatpush.msra.mxu0 0.0
  %41 = vmatpush.msra.mxu0 0.0
  %42 = vmatpush.msra.mxu0 0.0
  %43 = vmatpush.msra.mxu0 %v19
  %44 = vmatpush.msra.mxu0 %v18
  %45 = vmatpush.msra.mxu0 %v17
  %46 = vmatpush.msra.mxu0 %v16
  %47 = vmatmul.f32.gmra.mxu0 %v26
  %v48 = vpop.f32.mrf.mxu0
  %v49 = vadd.f32 %v22, %v48
  %50 = vmatmul.f32.gmra.mxu0 %v29
  %v51 = vpop.f32.mrf.mxu0
  %v52 = vadd.f32 %v22, %v51
  %53 = vdwg.mxu0
  %vm54 = vcmask 15360
  %55 = vst.msk [vmem:[%s3] sm:$0xff] %vm54, %v49
  %56 = vst.msk [vmem:[%s3 + $0x8] sm:$0xff] %vm54, %v52
  // Predicated region
  $region14: #{tpu_custom_call.1} parent=0 // pred_check
    _
  $region15: #{tpu_custom_call.1} parent=0 // pred_check_branch
    %58 = sbr.rel (0) target = $region17
  $region16: #{tpu_custom_call.1} parent=0 // pred_region
    _
  $region17: #{tpu_custom_call.1} parent=0 // pred_fallthru
    _
  // Predicated region
  $region18: #{tpu_custom_call.1} parent=0 // pred_check
    _
  $region19: #{tpu_custom_call.1} parent=0 // pred_check_branch
    %60 = sbr.rel (0) target = $region21
  $region20: #{tpu_custom_call.1} parent=0 // pred_region
    _
  $region21: #{tpu_custom_call.1} parent=0 // pred_fallthru
    _

// kernel: tpu_custom_call.1
$region0: #{tpu_custom_call.1}
  #allocation0 [shape = 'u32[]', space=smem, size = 0x4, offset = 0x4, fixed_abs, tag = 'smem constant byte address 0x4 - core index']
  #allocation1 [shape = 'u32[72,128]{1,0:T(1,128)}', space=vmem, size = 0x9000, scoped, tag = 'internal scratch']
  %s0 = inlined_call_operand.vmem [shape: f32[16,32], index: 0, kind: input, shape index: {}]
  %s1 = inlined_call_operand.vmem [shape: f32[32,2], index: 1, kind: input, shape index: {}]
  %s2 = inlined_call_operand.vmem [shape: f32[1,2], index: 2, kind: input, shape index: {}]
  %s3 = inlined_call_operand.vmem [shape: f32[16,2], index: 3, kind: output, shape index: {}]
  %s4 = sld [smem:[#allocation0]]
  $region22: #{tpu_custom_call.1} parent=0
    _
  %s6 = ssub.s32 1, %s4
  %s7 = scalar_select 0, %s6, %s4
  // Predicated region
  $region2: #{tpu_custom_call.1} parent=0 // pred_check
    _
  $region3: #{tpu_custom_call.1} parent=0 // pred_check_branch
    %9 = sbr.rel (0) target = $region5
  $region4: #{tpu_custom_call.1} parent=0 // pred_region
    _
  $region5: #{tpu_custom_call.1} parent=0 // pred_fallthru
    _
  // Predicated region
  $region6: #{tpu_custom_call.1} parent=0 // pred_check
    _
  $region7: #{tpu_custom_call.1} parent=0 // pred_check_branch
    %11 = sbr.rel (0) target = $region9
  $region8: #{tpu_custom_call.1} parent=0 // pred_region
    _
  $region9: #{tpu_custom_call.1} parent=0 // pred_fallthru
    _
  // Predicated region
  $region10: #{tpu_custom_call.1} parent=0 // pred_check
    _
  $region11: #{tpu_custom_call.1} parent=0 // pred_check_branch
    %13 = sbr.rel (0) target = $region13
  $region12: #{tpu_custom_call.1} parent=0 // pred_region
    _
  $region13: #{tpu_custom_call.1} parent=0 // pred_fallthru
    _
  %v14 = vld [vmem:[%s0] sm:$0xff]
  %v15 = vld [vmem:[%s0 + $0x8] sm:$0xff]
  %v16 = vld [vmem:[%s1] sm:$0xff]
  %v17 = vld [vmem:[%s1 + $0x8] sm:$0xff]
  %v18 = vld [vmem:[%s1 + $0x10] sm:$0xff]
  %v19 = vld [vmem:[%s1 + $0x18] sm:$0xff]
  %v20 = vld [vmem:[%s2] sm:$0x1]
  %v22 = vperm.slane %v20, 0
  %vm24 = vcmask 261120
  %v26 = vsel %vm24, %v14, 0
  %v29 = vsel %vm24, %v15, 0
  %31 = vmatpush.msra.mxu0 0.0
  %32 = vmatpush.msra.mxu0 0.0
  %33 = vmatpush.msra.mxu0 0.0
  %34 = vmatpush.msra.mxu0 0.0
  %35 = vmatpush.msra.mxu0 0.0
  %36 = vmatpush.msra.mxu0 0.0
  %37 = vmatpush.msra.mxu0 0.0
  %38 = vmatpush.msra.mxu0 0.0
  %39 = vmatpush.msra.mxu0 0.0
  %40 = vmatpush.msra.mxu0 0.0
  %41 = vmatpush.msra.mxu0 0.0
  %42 = vmatpush.msra.mxu0 0.0
  %43 = vmatpush.msra.mxu0 %v19
  %44 = vmatpush.msra.mxu0 %v18
  %45 = vmatpush.msra.mxu0 %v17
  %46 = vmatpush.msra.mxu0 %v16
  %47 = vmatmul.f32.gmra.mxu0 %v26
  %v48 = vpop.f32.mrf.mxu0
  %v49 = vadd.f32 %v22, %v48
  %50 = vmatmul.f32.gmra.mxu0 %v29
  %v51 = vpop.f32.mrf.mxu0
  %v52 = vadd.f32 %v22, %v51
  %53 = vdwg.mxu0
  %vm54 = vcmask 15360
  %55 = vst.msk [vmem:[%s3] sm:$0xff] %vm54, %v49
  %56 = vst.msk [vmem:[%s3 + $0x8] sm:$0xff] %vm54, %v52
  // Predicated region
  $region14: #{tpu_custom_call.1} parent=0 // pred_check
    _
  $region15: #{tpu_custom_call.1} parent=0 // pred_check_branch
    %58 = sbr.rel (0) target = $region17
  $region16: #{tpu_custom_call.1} parent=0 // pred_region
    _
  $region17: #{tpu_custom_call.1} parent=0 // pred_fallthru
    _
  // Predicated region
  $region18: #{tpu_custom_call.1} parent=0 // pred_check
    _
  $region19: #{tpu_custom_call.1} parent=0 // pred_check_branch
    %60 = sbr.rel (0) target = $region21
  $region20: #{tpu_custom_call.1} parent=0 // pred_region
    _
  $region21: #{tpu_custom_call.1} parent=0 // pred_fallthru
    _

</llo_original>
